<compile_context>
chip_gen: v6e
topology: v6e:2x2x1
jax: 0.10.0
libtpu: 0.0.40
codegen_flags: <defaults>
</compile_context>

<pallas_src>
from functools import partial

import jax
import jax.numpy as jnp
from jax.experimental import pallas as pl
from jax.experimental.pallas import tpu as pltpu

LANE = 128  # lane-dense padding target for the last dim of every operand


def mlp_kernel(x_raw_ref, w1_ref, w2_ref, o_ref):
    # ---- fused preprocessing: X = X_raw / max(X_raw, axis=0) (column-wise) ----
    x_raw = x_raw_ref[...]                               # (B, 128) f32
    x_max = jnp.max(x_raw, axis=0, keepdims=True)        # (1, 128)
    # Safe per-column reciprocal: padded (all-zero) columns stay exactly 0 and
    # no 0/0 NaN intermediate is ever formed.  (Exact 1/x, not approx, to stay
    # inside the 1e-5 tolerance.)
    inv = jnp.where(x_max > 0.0, 1.0 / x_max, 0.0)       # (1, 128)
    x = x_raw * inv                                      # VALU multiply

    # ---- forward pass: o = sigmoid(sigmoid(X @ W1) @ W2) ----
    z = jnp.dot(x, w1_ref[...], preferred_element_type=jnp.float32)
    z2 = jax.nn.sigmoid(z)                               # EUP exp + reciprocal
    z3 = jnp.dot(z2, w2_ref[...], preferred_element_type=jnp.float32)
    o_ref[...] = jax.nn.sigmoid(z3).astype(o_ref.dtype)


def _pad2d(a, rows, cols):
    r, c = a.shape
    return jnp.pad(a, ((0, rows - r), (0, cols - c)))    # zero padding (exactness)


def make_padded_weights(w1, w2):
    """One-time (init-time) lane-dense zero-padding of the weights to 128x128.

    Zero padding keeps the math exact: padded W rows/cols contribute 0 to the
    real output columns.  Call this once, reuse the result on every forward.
    """
    w1p = _pad2d(jnp.asarray(w1, jnp.float32), LANE, LANE)
    w2p = _pad2d(jnp.asarray(w2, jnp.float32), LANE, LANE)
    return jax.block_until_ready(w1p), jax.block_until_ready(w2p)


@partial(jax.jit, static_argnames=("out_dim",))
def neural_network_forward(x_raw, w1p, w2p, *, out_dim):
    """x_raw: (B, inputSize) UNNORMALIZED input; w1p/w2p: pre-padded (128,128)."""
    B, in_dim = x_raw.shape

    # Only the activation pad remains in the per-call path; allow_input_fusion
    # lets XLA fuse it into the custom-call operand (no extra HBM slab).
    xp = jnp.pad(x_raw.astype(jnp.float32), ((0, 0), (0, LANE - in_dim)))

    cost = pl.CostEstimate(
        flops=2 * (2 * B * LANE * LANE),            # two (B,128)x(128,128) matmuls
        transcendentals=4 * B * LANE,               # 2 sigmoids x (exp + recip) per elem
        bytes_accessed=4 * (B * LANE               # X slab in
                            + 2 * LANE * LANE      # W1, W2 in
                            + B * LANE),           # output slab out
    )

    out_padded = pl.pallas_call(
        mlp_kernel,
        out_shape=jax.ShapeDtypeStruct((B, LANE), jnp.float32),
        in_specs=[
            pl.BlockSpec(memory_space=pltpu.MemorySpace.VMEM),
            pl.BlockSpec(memory_space=pltpu.MemorySpace.VMEM),
            pl.BlockSpec(memory_space=pltpu.MemorySpace.VMEM),
        ],
        out_specs=pl.BlockSpec(memory_space=pltpu.MemorySpace.VMEM),
        compiler_params=pltpu.CompilerParams(
            allow_input_fusion=[True, False, False],  # fuse the X pad only
        ),
        cost_estimate=cost,
    )(xp, w1p, w2p)

    # Padded output columns are sigmoid(0) = 0.5; slice back to the real width.
    return out_padded[:, :out_dim]


if __name__ == "__main__":
    input_size, hidden_size, output_size = 10, 10, 10
    batch = 8

    key = jax.random.PRNGKey(0)
    kx, kw1, kw2 = jax.random.split(key, 3)

    # Deterministic "torch.randn"-style weights (shapes from the module __init__).
    W1 = jax.random.normal(kw1, (input_size, hidden_size), dtype=jnp.float32)
    W2 = jax.random.normal(kw2, (hidden_size, output_size), dtype=jnp.float32)

    # Init-time, one-shot padding of the parameters (hoisted out of the forward).
    W1p, W2p = make_padded_weights(W1, W2)

    # Raw (unscaled) non-negative inputs; the kernel fuses X = X_raw / column_max.
    X_raw = jax.random.uniform(
        kx, (batch, input_size), dtype=jnp.float32, minval=0.0, maxval=100.0
    )

    out = neural_network_forward(X_raw, W1p, W2p, out_dim=output_size)
    out = jax.block_until_ready(out)

    # Pure-JAX reference of preprocessing + forward pass.
    X_max = jnp.max(X_raw, axis=0, keepdims=True)
    X = X_raw / X_max
    ref = 1.0 / (1.0 + jnp.exp(-((1.0 / (1.0 + jnp.exp(-(X @ W1)))) @ W2)))

    assert out.shape == (batch, output_size)
    assert jnp.allclose(out, ref, atol=1e-5, rtol=1e-5)

    print("KERNEL_OK")
</pallas_src>

<mosaic_0001>
module attributes {stable_mosaic.version = 11 : i64} {
  func.func @mlp_kernel(%arg0: memref<8x128xf32, #tpu.memory_space<vmem>>, %arg1: memref<128x128xf32, #tpu.memory_space<vmem>>, %arg2: memref<128x128xf32, #tpu.memory_space<vmem>>, %arg3: memref<8x128xf32, #tpu.memory_space<vmem>>) attributes {dimension_semantics = [], scalar_prefetch = 0 : i64, scratch_operands = 0 : i64, tpu.core_type = #tpu.core_type<tc>} {
    %c0 = arith.constant 0 : index
    %c0_0 = arith.constant 0 : index
    %0 = vector.load %arg0[%c0, %c0_0] : memref<8x128xf32, #tpu.memory_space<vmem>>, vector<8x128xf32>
    %cst = arith.constant dense<0xFF800000> : vector<128xf32>
    %1 = vector.multi_reduction <maximumf>, %0, %cst [0] : vector<8x128xf32> to vector<128xf32>
    %2 = vector.shape_cast %1 : vector<128xf32> to vector<1x128xf32>
    %cst_1 = arith.constant 0.000000e+00 : f32
    %3 = vector.broadcast %cst_1 : f32 to vector<1x128xf32>
    %4 = arith.cmpf ogt, %2, %3 : vector<1x128xf32>
    %cst_2 = arith.constant 1.000000e+00 : f32
    %5 = vector.broadcast %cst_2 : f32 to vector<1x128xf32>
    %6 = arith.divf %5, %2 : vector<1x128xf32>
    %cst_3 = arith.constant 0.000000e+00 : f32
    %7 = vector.broadcast %cst_3 : f32 to vector<1x128xf32>
    %8 = arith.select %4, %6, %7 : vector<1x128xi1>, vector<1x128xf32>
    %9 = vector.broadcast %8 : vector<1x128xf32> to vector<8x128xf32>
    %10 = arith.mulf %0, %9 : vector<8x128xf32>
    %c0_4 = arith.constant 0 : index
    %c0_5 = arith.constant 0 : index
    %11 = vector.load %arg1[%c0_4, %c0_5] : memref<128x128xf32, #tpu.memory_space<vmem>>, vector<128x128xf32>
    %cst_6 = arith.constant dense<0.000000e+00> : vector<8x128xf32>
    %12 = tpu.matmul %10, %11, %cst_6 {dimension_numbers = #tpu.dot_dimension_numbers<[1], [0], [0], [1], [0, 0, 1, 1], [], []>} : vector<8x128xf32>, vector<128x128xf32>, vector<8x128xf32> -> vector<8x128xf32>
    %13 = arith.negf %12 : vector<8x128xf32>
    %14 = math.exp %13 : vector<8x128xf32>
    %cst_7 = arith.constant 1.000000e+00 : f32
    %15 = vector.broadcast %cst_7 : f32 to vector<8x128xf32>
    %16 = arith.addf %15, %14 : vector<8x128xf32>
    %17 = arith.divf %15, %16 : vector<8x128xf32>
    %c0_8 = arith.constant 0 : index
    %c0_9 = arith.constant 0 : index
    %18 = vector.load %arg2[%c0_8, %c0_9] : memref<128x128xf32, #tpu.memory_space<vmem>>, vector<128x128xf32>
    %cst_10 = arith.constant dense<0.000000e+00> : vector<8x128xf32>
    %19 = tpu.matmul %17, %18, %cst_10 {dimension_numbers = #tpu.dot_dimension_numbers<[1], [0], [0], [1], [0, 0, 1, 1], [], []>} : vector<8x128xf32>, vector<128x128xf32>, vector<8x128xf32> -> vector<8x128xf32>
    %20 = arith.negf %19 : vector<8x128xf32>
    %21 = math.exp %20 : vector<8x128xf32>
    %cst_11 = arith.constant 1.000000e+00 : f32
    %22 = vector.broadcast %cst_11 : f32 to vector<8x128xf32>
    %23 = arith.addf %22, %21 : vector<8x128xf32>
    %24 = arith.divf %22, %23 : vector<8x128xf32>
    %c0_12 = arith.constant 0 : index
    %c0_13 = arith.constant 0 : index
    %25 = vector.load %arg3[%c0_12, %c0_13] : memref<8x128xf32, #tpu.memory_space<vmem>>, vector<8x128xf32>
    tpu.vector_store %arg3[%c0_12, %c0_13], %24 {strides = array<i32>} : memref<8x128xf32, #tpu.memory_space<vmem>>, vector<8x128xf32>,
    return
  }
}

</mosaic_0001>

<llo_original>
// kernel: neural_network_forward.2
$region0: #{neural_network_forward.2}
  #allocation0 [shape = 'u32[]', space=smem, size = 0x4, offset = 0x4, fixed_abs, tag = 'smem constant byte address 0x4 - core index']
  #allocation1 [shape = 'u32[144,128]{1,0:T(1,128)}', space=vmem, size = 0x12000, scoped, tag = 'internal scratch']
  #allocation2 [shape = 'u32[2048]{0}', space=vmem, size = 0x2000, scoped, tag = 'scoped memory for neural_network_forward.2']
  #allocation3 [shape = 'u32[2048]{0}', space=vmem, size = 0x2000, scoped, tag = 'scoped memory for neural_network_forward.2']
  #allocation4 [shape = 'u32[2048]{0}', space=vmem, size = 0x2000, scoped, tag = 'scoped memory for neural_network_forward.2']
  #allocation5 [shape = 'u32[2048]{0}', space=vmem, size = 0x2000, scoped, tag = 'scoped memory for neural_network_forward.2']
  #allocation6 [shape = 'u32[2048]{0}', space=vmem, size = 0x2000, scoped, tag = 'scoped memory for neural_network_forward.2']
  %s0 = inlined_call_operand.hbm [shape: f32[128,128], index: 0, kind: input, shape index: {}]
  %s1 = inlined_call_operand.hbm [shape: f32[128,128], index: 1, kind: input, shape index: {}]
  %s2 = inlined_call_operand.hbm [shape: f32[8,10], index: 2, kind: input, shape index: {}]
  %s3 = inlined_call_operand.<no memory space> [shape: f32[], index: 3, kind: input, shape index: {}]
  %s4 = inlined_call_operand.hbm [shape: f32[8,128], index: 4, kind: output, shape index: {}]
  %s5 = sld [smem:[#allocation0]]
  $region34: #{neural_network_forward.2} parent=0
    _
  %s7 = ssub.s32 1, %s5
  %s8 = scalar_select 0, %s7, %s5
  %v9 = vstv %s3
  $region1: #{neural_network_forward.2} parent=0
    #allocation7 [shape = 'u8[4096]{0}', space=vmem, size = 0x1000, scoped, tag = 'operand span for operand 2']
    #allocation8 [shape = 's32[1]{0}', space=sflag, size = 0x4, scoped, tag = 'scoped memory for neural_network_forward.2']
    #allocation9 [shape = 's32[1]{0}', space=sflag, size = 0x4, scoped, tag = 'scoped memory for neural_network_forward.2']
    #allocation10 [shape = 'u8[65536]{0}', space=vmem, size = 0x10000, scoped, tag = 'input window, operand 1, single buffered']
    #allocation11 [shape = 's32[1]{0}', space=sflag, size = 0x4, scoped, tag = 'scoped memory for neural_network_forward.2']
    #allocation12 [shape = 'u8[65536]{0}', space=vmem, size = 0x10000, scoped, tag = 'input window, operand 2, single buffered']
    #allocation13 [shape = 'u8[4096]{0}', space=vmem, size = 0x1000, scoped, tag = 'output window, operand 0, single buffered']
    #allocation14 [shape = 'u8[4096]{0}', space=vmem, size = 0x1000, dematerialized = true, scoped, tag = 'FusionAdapter Buffer %fusion.1 = f32[8,128]{1,0:T(8,128)} fusion(%param_2.1, %param_3), kind=kLoop, calls=%fused_computation.1.clone, metadata={op_name="jit(neural_network_forward)/jit(_pad)/pad" stack_frame_id=1}']
    %10 = vsyncpa [#allocation8], 0
    %11 = vsyncpa [#allocation11], 0
    %12 = vsyncpa [#allocation9], 0
    // Predicated region
    $region2: #{neural_network_forward.2} parent=1 // pred_check
      _
    $region3: #{neural_network_forward.2} parent=1 // pred_check_branch
      %14 = sbr.rel (0) target = $region5
    $region4: #{neural_network_forward.2} parent=1 // pred_region
      %s16 = ssub.s32 128, 128
      %17 = vsyncadd [#allocation8], %s16
      %s19 = sshll.u32 [#allocation7], 4
      %s20 = int_to_ptr.vmem [resolvable:$true] %s19
      %22 = dma.hbm_to_vmem [thread:$0]  %s2, 128, %s20, [#allocation8]
    $region5: #{neural_network_forward.2} parent=1 // pred_fallthru
      _
    // Predicated region
    $region6: #{neural_network_forward.2} parent=1 // pred_check
      _
    $region7: #{neural_network_forward.2} parent=1 // pred_check_branch
      %24 = sbr.rel (0) target = $region9
    $region8: #{neural_network_forward.2} parent=1 // pred_region
      %s26 = ssub.s32 2048, 2048
      %27 = vsyncadd [#allocation11], %s26
      %s28 = sshll.u32 [#allocation10], 4
      %s29 = int_to_ptr.vmem [resolvable:$true] %s28
      %34 = dma.hbm_to_vmem [thread:$0]  %s0, 2048, %s29, [#allocation11], 128, 128, 8
    $region9: #{neural_network_forward.2} parent=1 // pred_fallthru
      _
    // Predicated region
    $region10: #{neural_network_forward.2} parent=1 // pred_check
      _
    $region11: #{neural_network_forward.2} parent=1 // pred_check_branch
      %36 = sbr.rel (0) target = $region13
    $region12: #{neural_network_forward.2} parent=1 // pred_region
      %s38 = ssub.s32 2048, 2048
      %39 = vsyncadd [#allocation11], %s38
      %s40 = sshll.u32 [#allocation12], 4
      %s41 = int_to_ptr.vmem [resolvable:$true] %s40
      %46 = dma.hbm_to_vmem [thread:$0]  %s1, 2048, %s41, [#allocation11], 128, 128, 8
    $region13: #{neural_network_forward.2} parent=1 // pred_fallthru
      _
    // Predicated region
    $region14: #{neural_network_forward.2} parent=1 // pred_check
      _
    $region15: #{neural_network_forward.2} parent=1 // pred_check_branch
      %48 = sbr.rel (0) target = $region17
    $region16: #{neural_network_forward.2} parent=1 // pred_region
      %49 = dma.done [#allocation8], 128
    $region17: #{neural_network_forward.2} parent=1 // pred_fallthru
      _
    // Predicated region
    $region18: #{neural_network_forward.2} parent=1 // pred_check
      _
    $region19: #{neural_network_forward.2} parent=1 // pred_check_branch
      %51 = sbr.rel (0) target = $region21
    $region20: #{neural_network_forward.2} parent=1 // pred_region
      %52 = dma.done [#allocation11], 2048
    $region21: #{neural_network_forward.2} parent=1 // pred_fallthru
      _
    // Predicated region
    $region22: #{neural_network_forward.2} parent=1 // pred_check
      _
    $region23: #{neural_network_forward.2} parent=1 // pred_check_branch
      %54 = sbr.rel (0) target = $region25
    $region24: #{neural_network_forward.2} parent=1 // pred_region
      %55 = dma.done [#allocation11], 2048
    $region25: #{neural_network_forward.2} parent=1 // pred_fallthru
      _
    %v56 = vld [vmem:[#allocation7] sm:$0xff]
    %v57 = vlaneseq
    %v58 = vand.u32 %v57, 127
    %vm60 = vcmp.lt.s32.totalorder %v58, 10
    %v61 = vsel %vm60, %v56, %v9
    %s63 = ssub.s32 256, 1
    %64 = vst [vmem:[#allocation14] sm:%s63] %v61
    %v65 = vld [vmem:[#allocation14] sm:$0xff]
    %v66 = vrot.slane %v65, 4
    %v67 = vmax.f32 %v65, %v66
    %v68 = vrot.slane %v67, 2
    %v69 = vmax.f32 %v67, %v68
    %v70 = vrot.slane %v69, 1
    %v71 = vmax.f32 %v69, %v70
    %vm72 = vcmp.gt.f32.partialorder %v71, 0.0
    %v73 = vrcp.pop %v71
    %v74 = vmul.f32 1.0, %v73
    %v75 = vsel %vm72, %v74, 0.0
    %v76 = vmul.f32 %v65, %v75
    %v77 = vld [vmem:[#allocation10] sm:$0xff]
    %v78 = vld [vmem:[#allocation10 + $0x8] sm:$0xff]
    %v79 = vld [vmem:[#allocation10 + $0x10] sm:$0xff]
    %v80 = vld [vmem:[#allocation10 + $0x18] sm:$0xff]
    %v81 = vld [vmem:[#allocation10 + $0x20] sm:$0xff]
    %v82 = vld [vmem:[#allocation10 + $0x28] sm:$0xff]
    %v83 = vld [vmem:[#allocation10 + $0x30] sm:$0xff]
    %v84 = vld [vmem:[#allocation10 + $0x38] sm:$0xff]
    %v85 = vld [vmem:[#allocation10 + $0x40] sm:$0xff]
    %v86 = vld [vmem:[#allocation10 + $0x48] sm:$0xff]
    %v87 = vld [vmem:[#allocation10 + $0x50] sm:$0xff]
    %v88 = vld [vmem:[#allocation10 + $0x58] sm:$0xff]
    %v89 = vld [vmem:[#allocation10 + $0x60] sm:$0xff]
    %v90 = vld [vmem:[#allocation10 + $0x68] sm:$0xff]
    %v91 = vld [vmem:[#allocation10 + $0x70] sm:$0xff]
    %v92 = vld [vmem:[#allocation10 + $0x78] sm:$0xff]
    %93 = vmatprep.subr.mxu0 0.0
    %94 = vmatpush1.msra.mxu0 %v92
    %95 = vmatprep.subr.mxu0 0.0
    %96 = vmatpush1.msra.mxu0 %v91
    %97 = vmatprep.subr.mxu0 0.0
    %98 = vmatpush1.msra.mxu0 %v90
    %99 = vmatprep.subr.mxu0 0.0
    %100 = vmatpush1.msra.mxu0 %v89
    %101 = vmatprep.subr.mxu0 0.0
    %102 = vmatpush1.msra.mxu0 %v88
    %103 = vmatprep.subr.mxu0 0.0
    %104 = vmatpush1.msra.mxu0 %v87
    %105 = vmatprep.subr.mxu0 0.0
    %106 = vmatpush1.msra.mxu0 %v86
    %107 = vmatprep.subr.mxu0 0.0
    %108 = vmatpush1.msra.mxu0 %v85
    %109 = vmatprep.subr.mxu0 0.0
    %110 = vmatpush1.msra.mxu0 %v84
    %111 = vmatprep.subr.mxu0 0.0
    %112 = vmatpush1.msra.mxu0 %v83
    %113 = vmatprep.subr.mxu0 0.0
    %114 = vmatpush1.msra.mxu0 %v82
    %115 = vmatprep.subr.mxu0 0.0
    %116 = vmatpush1.msra.mxu0 %v81
    %117 = vmatprep.subr.mxu0 0.0
    %118 = vmatpush1.msra.mxu0 %v80
    %119 = vmatprep.subr.mxu0 0.0
    %120 = vmatpush1.msra.mxu0 %v79
    %121 = vmatprep.subr.mxu0 0.0
    %122 = vmatpush1.msra.mxu0 %v78
    %123 = vmatprep.subr.mxu0 0.0
    %124 = vmatpush1.msra.mxu0 %v77
    %125 = vmatprep.subr.mxu0 0.0
    %126 = vmatpush2.msra.mxu0 0.0
    %127 = vmatprep.subr.mxu0 0.0
    %128 = vmatpush2.msra.mxu0 0.0
    %129 = vmatprep.subr.mxu0 0.0
    %130 = vmatpush2.msra.mxu0 0.0
    %131 = vmatprep.subr.mxu0 0.0
    %132 = vmatpush2.msra.mxu0 0.0
    %133 = vmatprep.subr.mxu0 0.0
    %134 = vmatpush2.msra.mxu0 0.0
    %135 = vmatprep.subr.mxu0 0.0
    %136 = vmatpush2.msra.mxu0 0.0
    %137 = vmatprep.subr.mxu0 0.0
    %138 = vmatpush2.msra.mxu0 0.0
    %139 = vmatprep.subr.mxu0 0.0
    %140 = vmatpush2.msra.mxu0 0.0
    %141 = vmatprep.subr.mxu0 0.0
    %142 = vmatpush2.msra.mxu0 0.0
    %143 = vmatprep.subr.mxu0 0.0
    %144 = vmatpush2.msra.mxu0 0.0
    %145 = vmatprep.subr.mxu0 0.0
    %146 = vmatpush2.msra.mxu0 0.0
    %147 = vmatprep.subr.mxu0 0.0
    %148 = vmatpush2.msra.mxu0 0.0
    %149 = vmatprep.subr.mxu0 0.0
    %150 = vmatpush2.msra.mxu0 0.0
    %151 = vmatprep.subr.mxu0 0.0
    %152 = vmatpush2.msra.mxu0 0.0
    %153 = vmatprep.subr.mxu0 0.0
    %154 = vmatpush2.msra.mxu0 0.0
    %155 = vmatprep.subr.mxu0 0.0
    %156 = vmatpush2.msra.mxu0 0.0
    %157 = vmatprep.mubr.f32.mxu0 0.0
    %158 = vmatmul.mubr.f32.gmra.mxu0 %v76
    %v159 = vpop.f32.mrf.mxu0
    %v160 = vadd.f32 0.0, %v159
    %v161 = vpop.f32.mrf.mxu0
    %162 = vdwg.mxu0
    %v163 = vxor.u32 %v160, 2147483648
    %v164 = vmul.f32 %v163, 1.442695
    %v165 = vpow.pop %v164
    %v166 = vadd.f32 %v165, 1.0
    %v167 = vrcp.pop %v166
    %v168 = vmul.f32 1.0, %v167
    %v169 = vld [vmem:[#allocation12] sm:$0xff]
    %v170 = vld [vmem:[#allocation12 + $0x8] sm:$0xff]
    %v171 = vld [vmem:[#allocation12 + $0x10] sm:$0xff]
    %v172 = vld [vmem:[#allocation12 + $0x18] sm:$0xff]
    %v173 = vld [vmem:[#allocation12 + $0x20] sm:$0xff]
    %v174 = vld [vmem:[#allocation12 + $0x28] sm:$0xff]
    %v175 = vld [vmem:[#allocation12 + $0x30] sm:$0xff]
    %v176 = vld [vmem:[#allocation12 + $0x38] sm:$0xff]
    %v177 = vld [vmem:[#allocation12 + $0x40] sm:$0xff]
    %v178 = vld [vmem:[#allocation12 + $0x48] sm:$0xff]
    %v179 = vld [vmem:[#allocation12 + $0x50] sm:$0xff]
    %v180 = vld [vmem:[#allocation12 + $0x58] sm:$0xff]
    %v181 = vld [vmem:[#allocation12 + $0x60] sm:$0xff]
    %v182 = vld [vmem:[#allocation12 + $0x68] sm:$0xff]
    %v183 = vld [vmem:[#allocation12 + $0x70] sm:$0xff]
    %v184 = vld [vmem:[#allocation12 + $0x78] sm:$0xff]
    %185 = vmatprep.subr.mxu0 0.0
    %186 = vmatpush1.msra.mxu0 %v184
    %187 = vmatprep.subr.mxu0 0.0
    %188 = vmatpush1.msra.mxu0 %v183
    %189 = vmatprep.subr.mxu0 0.0
    %190 = vmatpush1.msra.mxu0 %v182
    %191 = vmatprep.subr.mxu0 0.0
    %192 = vmatpush1.msra.mxu0 %v181
    %193 = vmatprep.subr.mxu0 0.0
    %194 = vmatpush1.msra.mxu0 %v180
    %195 = vmatprep.subr.mxu0 0.0
    %196 = vmatpush1.msra.mxu0 %v179
    %197 = vmatprep.subr.mxu0 0.0
    %198 = vmatpush1.msra.mxu0 %v178
    %199 = vmatprep.subr.mxu0 0.0
    %200 = vmatpush1.msra.mxu0 %v177
    %201 = vmatprep.subr.mxu0 0.0
    %202 = vmatpush1.msra.mxu0 %v176
    %203 = vmatprep.subr.mxu0 0.0
    %204 = vmatpush1.msra.mxu0 %v175
    %205 = vmatprep.subr.mxu0 0.0
    %206 = vmatpush1.msra.mxu0 %v174
    %207 = vmatprep.subr.mxu0 0.0
    %208 = vmatpush1.msra.mxu0 %v173
    %209 = vmatprep.subr.mxu0 0.0
    %210 = vmatpush1.msra.mxu0 %v172
    %211 = vmatprep.subr.mxu0 0.0
    %212 = vmatpush1.msra.mxu0 %v171
    %213 = vmatprep.subr.mxu0 0.0
    %214 = vmatpush1.msra.mxu0 %v170
    %215 = vmatprep.subr.mxu0 0.0
    %216 = vmatpush1.msra.mxu0 %v169
    %217 = vmatprep.subr.mxu0 0.0
    %218 = vmatpush2.msra.mxu0 0.0
    %219 = vmatprep.subr.mxu0 0.0
    %220 = vmatpush2.msra.mxu0 0.0
    %221 = vmatprep.subr.mxu0 0.0
    %222 = vmatpush2.msra.mxu0 0.0
    %223 = vmatprep.subr.mxu0 0.0
    %224 = vmatpush2.msra.mxu0 0.0
    %225 = vmatprep.subr.mxu0 0.0
    %226 = vmatpush2.msra.mxu0 0.0
    %227 = vmatprep.subr.mxu0 0.0
    %228 = vmatpush2.msra.mxu0 0.0
    %229 = vmatprep.subr.mxu0 0.0
    %230 = vmatpush2.msra.mxu0 0.0
    %231 = vmatprep.subr.mxu0 0.0
    %232 = vmatpush2.msra.mxu0 0.0
    %233 = vmatprep.subr.mxu0 0.0
    %234 = vmatpush2.msra.mxu0 0.0
    %235 = vmatprep.subr.mxu0 0.0
    %236 = vmatpush2.msra.mxu0 0.0
    %237 = vmatprep.subr.mxu0 0.0
    %238 = vmatpush2.msra.mxu0 0.0
    %239 = vmatprep.subr.mxu0 0.0
    %240 = vmatpush2.msra.mxu0 0.0
    %241 = vmatprep.subr.mxu0 0.0
    %242 = vmatpush2.msra.mxu0 0.0
    %243 = vmatprep.subr.mxu0 0.0
    %244 = vmatpush2.msra.mxu0 0.0
    %245 = vmatprep.subr.mxu0 0.0
    %246 = vmatpush2.msra.mxu0 0.0
    %247 = vmatprep.subr.mxu0 0.0
    %248 = vmatpush2.msra.mxu0 0.0
    %249 = vmatprep.mubr.f32.mxu0 0.0
    %250 = vmatmul.mubr.f32.gmra.mxu0 %v168
    %v251 = vpop.f32.mrf.mxu0
    %v252 = vadd.f32 0.0, %v251
    %v253 = vpop.f32.mrf.mxu0
    %254 = vdwg.mxu0
    %v255 = vxor.u32 %v252, 2147483648
    %v256 = vmul.f32 %v255, 1.442695
    %v257 = vpow.pop %v256
    %v258 = vadd.f32 %v257, 1.0
    %v259 = vrcp.pop %v258
    %v260 = vmul.f32 1.0, %v259
    %261 = vst [vmem:[#allocation13] sm:$0xff] %v260
    // Predicated region
    $region26: #{neural_network_forward.2} parent=1 // pred_check
      _
    $region27: #{neural_network_forward.2} parent=1 // pred_check_branch
      %263 = sbr.rel (0) target = $region29
    $region28: #{neural_network_forward.2} parent=1 // pred_region
      %s265 = ssub.s32 128, 128
      %266 = vsyncadd [#allocation9], %s265
      %s268 = sshll.u32 [#allocation13], 4
      %s269 = int_to_ptr.vmem [resolvable:$true] %s268
      %271 = dma.vmem_to_hbm [thread:$0]  %s269, 128, %s4, [#allocation9]
    $region29: #{neural_network_forward.2} parent=1 // pred_fallthru
      _
    // Predicated region
    $region30: #{neural_network_forward.2} parent=1 // pred_check
      _
    $region31: #{neural_network_forward.2} parent=1 // pred_check_branch
      %273 = sbr.rel (0) target = $region33
    $region32: #{neural_network_forward.2} parent=1 // pred_region
      %274 = dma.done [#allocation9], 128
    $region33: #{neural_network_forward.2} parent=1 // pred_fallthru
      _
    %275 = vsyncpa [#allocation8], 1
    %276 = vsyncpa [#allocation11], 1
    %277 = vsyncpa [#allocation9], 1

</llo_original>
